<compile_context>
chip_gen: v6e
topology: v6e:2x2x1
jax: 0.10.0
libtpu: 0.0.40
codegen_flags: <defaults>
</compile_context>

<pallas_src>
import jax
import jax.numpy as jnp
from jax.experimental import pallas as pl
from jax.experimental.pallas import tpu as pltpu

IN_DIM = 28 * 28                 # 784 (streamed as the full last dim)
H1, H2, H3, OUT_PAD = 256, 128, 128, 128   # padded layer widths
OUT_DIM = 10                     # logical output width


def _round_up(n, m):
    return ((n + m - 1) // m) * m


def _pad2d(a, rows, cols):
    return jnp.pad(a, ((0, rows - a.shape[0]), (0, cols - a.shape[1])))


def mlp_kernel(x_ref,
               w1_ref, b1_ref,
               w2_ref, b2_ref,
               w3_ref, b3_ref,
               w4_ref, b4_ref,
               o_ref):
    # Layer 1: (TB,784)bf16 @ (784,256)bf16 -> f32, bias + ReLU in f32.
    h = jnp.dot(x_ref[...], w1_ref[...], preferred_element_type=jnp.float32)
    h = jnp.maximum(h + b1_ref[...], 0.0)
    # Layer 2: (TB,256) @ (256,128)
    h = jnp.dot(h.astype(jnp.bfloat16), w2_ref[...],
                preferred_element_type=jnp.float32)
    h = jnp.maximum(h + b2_ref[...], 0.0)
    # Layer 3: (TB,128) @ (128,128)
    h = jnp.dot(h.astype(jnp.bfloat16), w3_ref[...],
                preferred_element_type=jnp.float32)
    h = jnp.maximum(h + b3_ref[...], 0.0)
    # Layer 4: (TB,128) @ (128,128), no activation. Lane-dense (TB,128) store;
    # only the first 10 columns are logical outputs (sliced in the wrapper).
    h = jnp.dot(h.astype(jnp.bfloat16), w4_ref[...],
                preferred_element_type=jnp.float32)
    o_ref[...] = (h + b4_ref[...]).astype(o_ref.dtype)


def prepare_params(params):
    """Pad weights/biases once to 128-lane multiples; weights cast to bf16."""
    (w1, b1), (w2, b2), (w3, b3), (w4, b4) = params
    w1p = _pad2d(w1, IN_DIM, H1).astype(jnp.bfloat16)
    w2p = _pad2d(w2, H1, H2).astype(jnp.bfloat16)
    w3p = _pad2d(w3, H2, H3).astype(jnp.bfloat16)
    w4p = _pad2d(w4, H3, OUT_PAD).astype(jnp.bfloat16)
    b1p = _pad2d(b1, 1, H1).astype(jnp.float32)
    b2p = _pad2d(b2, 1, H2).astype(jnp.float32)
    b3p = _pad2d(b3, 1, H3).astype(jnp.float32)
    b4p = _pad2d(b4, 1, OUT_PAD).astype(jnp.float32)
    return (w1p, b1p, w2p, b2p, w3p, b3p, w4p, b4p)


def mlp_forward(x, padded_params, block_rows=1024):
    """x: any shape with trailing elements = 784 per example (NCHW images ok)."""
    x2d = x.reshape(-1, IN_DIM).astype(jnp.bfloat16)
    B = x2d.shape[0]

    # Row tile: multiple of 16 (bf16 sublane packing); single step for tiny B.
    tb = min(_round_up(block_rows, 16), _round_up(B, 16))
    padded_b = _round_up(B, tb)
    if padded_b != B:
        x2d = jnp.pad(x2d, ((0, padded_b - B), (0, 0)))

    w1, b1, w2, b2, w3, b3, w4, b4 = padded_params

    def const(shape):
        # Weights / biases: same block every grid step -> DMA'd once, resident.
        return pl.BlockSpec(shape, lambda i: (0, 0))

    out = pl.pallas_call(
        mlp_kernel,
        out_shape=jax.ShapeDtypeStruct((padded_b, OUT_PAD), jnp.float32),
        grid=(padded_b // tb,),
        in_specs=[
            pl.BlockSpec((tb, IN_DIM), lambda i: (i, 0)),   # streamed activations
            const((IN_DIM, H1)), const((1, H1)),
            const((H1, H2)),     const((1, H2)),
            const((H2, H3)),     const((1, H3)),
            const((H3, OUT_PAD)), const((1, OUT_PAD)),
        ],
        out_specs=pl.BlockSpec((tb, OUT_PAD), lambda i: (i, 0)),
        compiler_params=pltpu.CompilerParams(
            dimension_semantics=("parallel",)),
    )(x2d, w1, b1, w2, b2, w3, b3, w4, b4)

    return out[:B, :OUT_DIM]


def xavier_uniform(key, fan_in, fan_out):
    bound = (6.0 / (fan_in + fan_out)) ** 0.5
    # Stored as (in, out) -- transposed vs PyTorch's (out, in); xavier bound is
    # symmetric in fan_in/fan_out so the distribution is equivalent.
    return jax.random.uniform(key, (fan_in, fan_out), jnp.float32, -bound, bound)


def init_params(key):
    sizes = [(IN_DIM, 200), (200, 100), (100, 40), (40, OUT_DIM)]
    params = []
    for fi, fo in sizes:
        key, sub = jax.random.split(key)
        w = xavier_uniform(sub, fi, fo)
        b = jnp.zeros((1, fo), jnp.float32)   # init.constant_(bias, 0)
        params.append((w, b))
    return params


def ref_forward(x, params):
    h = x.reshape(-1, IN_DIM).astype(jnp.float32)
    (w1, b1), (w2, b2), (w3, b3), (w4, b4) = params
    h = jnp.maximum(h @ w1 + b1, 0.0)
    h = jnp.maximum(h @ w2 + b2, 0.0)
    h = jnp.maximum(h @ w3 + b3, 0.0)
    return h @ w4 + b4


if __name__ == "__main__":
    key = jax.random.PRNGKey(0)
    pkey, xkey = jax.random.split(key)
    params = init_params(pkey)
    padded_params = prepare_params(params)

    # MNIST-like input: batch=8, NCHW (8, 1, 28, 28); forward flattens to (8, 784)
    x = jax.random.normal(xkey, (8, 1, 28, 28), jnp.float32)

    out = mlp_forward(x, padded_params)
    jax.block_until_ready(out)
    assert out.shape == (8, OUT_DIM)

    # Correctness vs f32 reference; tolerance loosened for bf16 MXU matmuls.
    expected = ref_forward(x, params)
    assert jnp.allclose(out, expected, atol=1e-1, rtol=5e-2), float(
        jnp.max(jnp.abs(out - expected)))

    print("KERNEL_OK")
</pallas_src>

<mosaic_0001>
module attributes {stable_mosaic.version = 11 : i64} {
  func.func @mlp_kernel(%arg0: i32, %arg1: memref<16x784xbf16, #tpu.memory_space<vmem>>, %arg2: memref<784x256xbf16, #tpu.memory_space<vmem>>, %arg3: memref<1x256xf32, #tpu.memory_space<vmem>>, %arg4: memref<256x128xbf16, #tpu.memory_space<vmem>>, %arg5: memref<1x128xf32, #tpu.memory_space<vmem>>, %arg6: memref<128x128xbf16, #tpu.memory_space<vmem>>, %arg7: memref<1x128xf32, #tpu.memory_space<vmem>>, %arg8: memref<128x128xbf16, #tpu.memory_space<vmem>>, %arg9: memref<1x128xf32, #tpu.memory_space<vmem>>, %arg10: memref<16x128xf32, #tpu.memory_space<vmem>>) attributes {dimension_semantics = [#tpu.dimension_semantics<parallel>], iteration_bounds = array<i64: 1>, scalar_prefetch = 0 : i64, scratch_operands = 0 : i64, tpu.core_type = #tpu.core_type<tc>, window_params = [{transform_indices = @transform_0, window_bounds = array<i64: 16, 784>}, {pipeline_mode = #tpu.pipeline_mode<synchronous>, transform_indices = @transform_1, window_bounds = array<i64: 784, 256>}, {pipeline_mode = #tpu.pipeline_mode<synchronous>, transform_indices = @transform_2, window_bounds = array<i64: 1, 256>}, {pipeline_mode = #tpu.pipeline_mode<synchronous>, transform_indices = @transform_3, window_bounds = array<i64: 256, 128>}, {pipeline_mode = #tpu.pipeline_mode<synchronous>, transform_indices = @transform_4, window_bounds = array<i64: 1, 128>}, {pipeline_mode = #tpu.pipeline_mode<synchronous>, transform_indices = @transform_5, window_bounds = array<i64: 128, 128>}, {pipeline_mode = #tpu.pipeline_mode<synchronous>, transform_indices = @transform_6, window_bounds = array<i64: 1, 128>}, {pipeline_mode = #tpu.pipeline_mode<synchronous>, transform_indices = @transform_7, window_bounds = array<i64: 128, 128>}, {pipeline_mode = #tpu.pipeline_mode<synchronous>, transform_indices = @transform_8, window_bounds = array<i64: 1, 128>}, {transform_indices = @transform_9, window_bounds = array<i64: 16, 128>}]} {
    %c0 = arith.constant 0 : index
    %c0_0 = arith.constant 0 : index
    %0 = vector.load %arg1[%c0, %c0_0] : memref<16x784xbf16, #tpu.memory_space<vmem>>, vector<16x784xbf16>
    %c0_1 = arith.constant 0 : index
    %c0_2 = arith.constant 0 : index
    %1 = vector.load %arg2[%c0_1, %c0_2] : memref<784x256xbf16, #tpu.memory_space<vmem>>, vector<784x256xbf16>
    %cst = arith.constant dense<0.000000e+00> : vector<16x256xf32>
    %2 = tpu.matmul %0, %1, %cst {dimension_numbers = #tpu.dot_dimension_numbers<[1], [0], [0], [1], [0, 0, 1, 1], [], []>} : vector<16x784xbf16>, vector<784x256xbf16>, vector<16x256xf32> -> vector<16x256xf32>
    %c0_3 = arith.constant 0 : index
    %c0_4 = arith.constant 0 : index
    %3 = vector.load %arg3[%c0_3, %c0_4] : memref<1x256xf32, #tpu.memory_space<vmem>>, vector<1x256xf32>
    %4 = vector.broadcast %3 : vector<1x256xf32> to vector<16x256xf32>
    %5 = arith.addf %2, %4 : vector<16x256xf32>
    %cst_5 = arith.constant 0.000000e+00 : f32
    %6 = vector.broadcast %cst_5 : f32 to vector<16x256xf32>
    %7 = arith.maximumf %5, %6 : vector<16x256xf32>
    %8 = arith.truncf %7 : vector<16x256xf32> to vector<16x256xbf16>
    %c0_6 = arith.constant 0 : index
    %c0_7 = arith.constant 0 : index
    %9 = vector.load %arg4[%c0_6, %c0_7] : memref<256x128xbf16, #tpu.memory_space<vmem>>, vector<256x128xbf16>
    %cst_8 = arith.constant dense<0.000000e+00> : vector<16x128xf32>
    %10 = tpu.matmul %8, %9, %cst_8 {dimension_numbers = #tpu.dot_dimension_numbers<[1], [0], [0], [1], [0, 0, 1, 1], [], []>} : vector<16x256xbf16>, vector<256x128xbf16>, vector<16x128xf32> -> vector<16x128xf32>
    %c0_9 = arith.constant 0 : index
    %c0_10 = arith.constant 0 : index
    %11 = vector.load %arg5[%c0_9, %c0_10] : memref<1x128xf32, #tpu.memory_space<vmem>>, vector<1x128xf32>
    %12 = vector.broadcast %11 : vector<1x128xf32> to vector<16x128xf32>
    %13 = arith.addf %10, %12 : vector<16x128xf32>
    %cst_11 = arith.constant 0.000000e+00 : f32
    %14 = vector.broadcast %cst_11 : f32 to vector<16x128xf32>
    %15 = arith.maximumf %13, %14 : vector<16x128xf32>
    %16 = arith.truncf %15 : vector<16x128xf32> to vector<16x128xbf16>
    %c0_12 = arith.constant 0 : index
    %c0_13 = arith.constant 0 : index
    %17 = vector.load %arg6[%c0_12, %c0_13] : memref<128x128xbf16, #tpu.memory_space<vmem>>, vector<128x128xbf16>
    %cst_14 = arith.constant dense<0.000000e+00> : vector<16x128xf32>
    %18 = tpu.matmul %16, %17, %cst_14 {dimension_numbers = #tpu.dot_dimension_numbers<[1], [0], [0], [1], [0, 0, 1, 1], [], []>} : vector<16x128xbf16>, vector<128x128xbf16>, vector<16x128xf32> -> vector<16x128xf32>
    %c0_15 = arith.constant 0 : index
    %c0_16 = arith.constant 0 : index
    %19 = vector.load %arg7[%c0_15, %c0_16] : memref<1x128xf32, #tpu.memory_space<vmem>>, vector<1x128xf32>
    %20 = vector.broadcast %19 : vector<1x128xf32> to vector<16x128xf32>
    %21 = arith.addf %18, %20 : vector<16x128xf32>
    %cst_17 = arith.constant 0.000000e+00 : f32
    %22 = vector.broadcast %cst_17 : f32 to vector<16x128xf32>
    %23 = arith.maximumf %21, %22 : vector<16x128xf32>
    %24 = arith.truncf %23 : vector<16x128xf32> to vector<16x128xbf16>
    %c0_18 = arith.constant 0 : index
    %c0_19 = arith.constant 0 : index
    %25 = vector.load %arg8[%c0_18, %c0_19] : memref<128x128xbf16, #tpu.memory_space<vmem>>, vector<128x128xbf16>
    %cst_20 = arith.constant dense<0.000000e+00> : vector<16x128xf32>
    %26 = tpu.matmul %24, %25, %cst_20 {dimension_numbers = #tpu.dot_dimension_numbers<[1], [0], [0], [1], [0, 0, 1, 1], [], []>} : vector<16x128xbf16>, vector<128x128xbf16>, vector<16x128xf32> -> vector<16x128xf32>
    %c0_21 = arith.constant 0 : index
    %c0_22 = arith.constant 0 : index
    %27 = vector.load %arg9[%c0_21, %c0_22] : memref<1x128xf32, #tpu.memory_space<vmem>>, vector<1x128xf32>
    %28 = vector.broadcast %27 : vector<1x128xf32> to vector<16x128xf32>
    %29 = arith.addf %26, %28 : vector<16x128xf32>
    %c0_23 = arith.constant 0 : index
    %c0_24 = arith.constant 0 : index
    %30 = vector.load %arg10[%c0_23, %c0_24] : memref<16x128xf32, #tpu.memory_space<vmem>>, vector<16x128xf32>
    tpu.vector_store %arg10[%c0_23, %c0_24], %29 {strides = array<i32>} : memref<16x128xf32, #tpu.memory_space<vmem>>, vector<16x128xf32>,
    return
  }
  func.func @transform_0(%arg0: i32) -> (i32, i32) {
    %c0_i32 = arith.constant 0 : i32
    %c0_i32_0 = arith.constant 0 : i32
    return %arg0, %c0_i32 : i32, i32
  }
  func.func @transform_1(%arg0: i32) -> (i32, i32) {
    %c0_i32 = arith.constant 0 : i32
    %c0_i32_0 = arith.constant 0 : i32
    %c0_i32_1 = arith.constant 0 : i32
    return %c0_i32, %c0_i32_0 : i32, i32
  }
  func.func @transform_2(%arg0: i32) -> (i32, i32) {
    %c0_i32 = arith.constant 0 : i32
    %c0_i32_0 = arith.constant 0 : i32
    %c0_i32_1 = arith.constant 0 : i32
    return %c0_i32, %c0_i32_0 : i32, i32
  }
  func.func @transform_3(%arg0: i32) -> (i32, i32) {
    %c0_i32 = arith.constant 0 : i32
    %c0_i32_0 = arith.constant 0 : i32
    %c0_i32_1 = arith.constant 0 : i32
    return %c0_i32, %c0_i32_0 : i32, i32
  }
  func.func @transform_4(%arg0: i32) -> (i32, i32) {
    %c0_i32 = arith.constant 0 : i32
    %c0_i32_0 = arith.constant 0 : i32
    %c0_i32_1 = arith.constant 0 : i32
    return %c0_i32, %c0_i32_0 : i32, i32
  }
  func.func @transform_5(%arg0: i32) -> (i32, i32) {
    %c0_i32 = arith.constant 0 : i32
    %c0_i32_0 = arith.constant 0 : i32
    %c0_i32_1 = arith.constant 0 : i32
    return %c0_i32, %c0_i32_0 : i32, i32
  }
  func.func @transform_6(%arg0: i32) -> (i32, i32) {
    %c0_i32 = arith.constant 0 : i32
    %c0_i32_0 = arith.constant 0 : i32
    %c0_i32_1 = arith.constant 0 : i32
    return %c0_i32, %c0_i32_0 : i32, i32
  }
  func.func @transform_7(%arg0: i32) -> (i32, i32) {
    %c0_i32 = arith.constant 0 : i32
    %c0_i32_0 = arith.constant 0 : i32
    %c0_i32_1 = arith.constant 0 : i32
    return %c0_i32, %c0_i32_0 : i32, i32
  }
  func.func @transform_8(%arg0: i32) -> (i32, i32) {
    %c0_i32 = arith.constant 0 : i32
    %c0_i32_0 = arith.constant 0 : i32
    %c0_i32_1 = arith.constant 0 : i32
    return %c0_i32, %c0_i32_0 : i32, i32
  }
  func.func @transform_9(%arg0: i32) -> (i32, i32) {
    %c0_i32 = arith.constant 0 : i32
    %c0_i32_0 = arith.constant 0 : i32
    return %arg0, %c0_i32 : i32, i32
  }
}

</mosaic_0001>

<llo_original>
// kernel: tpu_custom_call.1
$region0: #{tpu_custom_call.1}
  #allocation0 [shape = 'u32[]', space=smem, size = 0x4, offset = 0x4, fixed_abs, tag = 'smem constant byte address 0x4 - core index']
  #allocation1 [shape = 'u32[144,128]{1,0:T(1,128)}', space=vmem, size = 0x12000, scoped, tag = 'internal scratch']
  %s0 = inlined_call_operand.hbm [shape: bf16[16,784], index: 0, kind: input, shape index: {}]
  %s1 = inlined_call_operand.hbm [shape: bf16[784,256], index: 1, kind: input, shape index: {}]
  %s2 = inlined_call_operand.vmem [shape: f32[1,256], index: 2, kind: input, shape index: {}]
  %s3 = inlined_call_operand.hbm [shape: bf16[256,128], index: 3, kind: input, shape index: {}]
  %s4 = inlined_call_operand.vmem [shape: f32[1,128], index: 4, kind: input, shape index: {}]
  %s5 = inlined_call_operand.hbm [shape: bf16[128,128], index: 5, kind: input, shape index: {}]
  %s6 = inlined_call_operand.vmem [shape: f32[1,128], index: 6, kind: input, shape index: {}]
  %s7 = inlined_call_operand.hbm [shape: bf16[128,128], index: 7, kind: input, shape index: {}]
  %s8 = inlined_call_operand.vmem [shape: f32[1,128], index: 8, kind: input, shape index: {}]
  %s9 = inlined_call_operand.hbm [shape: f32[16,128], index: 9, kind: output, shape index: {}]
  %s10 = sld [smem:[#allocation0]]
  $region66: #{tpu_custom_call.1} parent=0
    _
  %s12 = ssub.s32 1, %s10
  %s13 = scalar_select 0, %s12, %s10
  $region1: #{tpu_custom_call.1} parent=0
    #allocation2 [shape = 'u8[28672]{0}', space=vmem, size = 0x7000, scoped, tag = 'input window, operand 0, single buffered']
    #allocation3 [shape = 's32[1]{0}', space=sflag, size = 0x4, scoped, tag = 'scoped memory for tpu_custom_call.1']
    #allocation4 [shape = 's32[1]{0}', space=sflag, size = 0x4, scoped, tag = 'scoped memory for tpu_custom_call.1']
    #allocation5 [shape = 'u8[401408]{0}', space=vmem, size = 0x62000, scoped, tag = 'input window, operand 1, single buffered']
    #allocation6 [shape = 's32[1]{0}', space=sflag, size = 0x4, scoped, tag = 'scoped memory for tpu_custom_call.1']
    #allocation7 [shape = 'u8[65536]{0}', space=vmem, size = 0x10000, scoped, tag = 'input window, operand 3, single buffered']
    #allocation8 [shape = 'u8[32768]{0}', space=vmem, size = 0x8000, scoped, tag = 'input window, operand 5, single buffered']
    #allocation9 [shape = 's32[1]{0}', space=sflag, size = 0x4, scoped, tag = 'scoped memory for tpu_custom_call.1']
    #allocation10 [shape = 'u8[32768]{0}', space=vmem, size = 0x8000, scoped, tag = 'input window, operand 7, single buffered']
    #allocation11 [shape = 'u8[8192]{0}', space=vmem, size = 0x2000, scoped, tag = 'output window, operand 0, single buffered']
    %14 = vsyncpa [#allocation3], 0
    %15 = vsyncpa [#allocation6], 0
    %16 = vsyncpa [#allocation9], 0
    %17 = vsyncpa [#allocation4], 0
    // Predicated region
    $region2: #{tpu_custom_call.1} parent=1 // pred_check
      _
    $region3: #{tpu_custom_call.1} parent=1 // pred_check_branch
      %19 = sbr.rel (0) target = $region5
    $region4: #{tpu_custom_call.1} parent=1 // pred_region
      %s21 = ssub.s32 896, 896
      %22 = vsyncadd [#allocation3], %s21
      %s23 = sshll.u32 [#allocation2], 4
      %s24 = int_to_ptr.vmem [resolvable:$true] %s23
      %29 = dma.hbm_to_vmem [thread:$0]  %s0, 896, %s24, [#allocation3], 448, 448, 28
    $region5: #{tpu_custom_call.1} parent=1 // pred_fallthru
      _
    // Predicated region
    $region6: #{tpu_custom_call.1} parent=1 // pred_check
      _
    $region7: #{tpu_custom_call.1} parent=1 // pred_check_branch
      %31 = sbr.rel (0) target = $region9
    $region8: #{tpu_custom_call.1} parent=1 // pred_region
      %s33 = ssub.s32 12544, 12544
      %34 = vsyncadd [#allocation6], %s33
      %s35 = sshll.u32 [#allocation5], 4
      %s36 = int_to_ptr.vmem [resolvable:$true] %s35
      %41 = dma.hbm_to_vmem [thread:$0]  %s1, 12544, %s36, [#allocation6], 128, 128, 8
    $region9: #{tpu_custom_call.1} parent=1 // pred_fallthru
      _
    // Predicated region
    $region10: #{tpu_custom_call.1} parent=1 // pred_check
      _
    $region11: #{tpu_custom_call.1} parent=1 // pred_check_branch
      %43 = sbr.rel (0) target = $region13
    $region12: #{tpu_custom_call.1} parent=1 // pred_region
      _
    $region13: #{tpu_custom_call.1} parent=1 // pred_fallthru
      _
    // Predicated region
    $region14: #{tpu_custom_call.1} parent=1 // pred_check
      _
    $region15: #{tpu_custom_call.1} parent=1 // pred_check_branch
      %45 = sbr.rel (0) target = $region17
    $region16: #{tpu_custom_call.1} parent=1 // pred_region
      %s47 = ssub.s32 2048, 2048
      %48 = vsyncadd [#allocation6], %s47
      %s49 = sshll.u32 [#allocation7], 4
      %s50 = int_to_ptr.vmem [resolvable:$true] %s49
      %55 = dma.hbm_to_vmem [thread:$0]  %s3, 2048, %s50, [#allocation6], 64, 64, 4
    $region17: #{tpu_custom_call.1} parent=1 // pred_fallthru
      _
    // Predicated region
    $region18: #{tpu_custom_call.1} parent=1 // pred_check
      _
    $region19: #{tpu_custom_call.1} parent=1 // pred_check_branch
      %57 = sbr.rel (0) target = $region21
    $region20: #{tpu_custom_call.1} parent=1 // pred_region
      _
    $region21: #{tpu_custom_call.1} parent=1 // pred_fallthru
      _
    // Predicated region
    $region22: #{tpu_custom_call.1} parent=1 // pred_check
      _
    $region23: #{tpu_custom_call.1} parent=1 // pred_check_branch
      %59 = sbr.rel (0) target = $region25
    $region24: #{tpu_custom_call.1} parent=1 // pred_region
      %s61 = ssub.s32 1024, 1024
      %62 = vsyncadd [#allocation9], %s61
      %s63 = sshll.u32 [#allocation8], 4
      %s64 = int_to_ptr.vmem [resolvable:$true] %s63
      %69 = dma.hbm_to_vmem [thread:$0]  %s5, 1024, %s64, [#allocation9], 64, 64, 4
    $region25: #{tpu_custom_call.1} parent=1 // pred_fallthru
      _
    // Predicated region
    $region26: #{tpu_custom_call.1} parent=1 // pred_check
      _
    $region27: #{tpu_custom_call.1} parent=1 // pred_check_branch
      %71 = sbr.rel (0) target = $region29
    $region28: #{tpu_custom_call.1} parent=1 // pred_region
      _
    $region29: #{tpu_custom_call.1} parent=1 // pred_fallthru
      _
    // Predicated region
    $region30: #{tpu_custom_call.1} parent=1 // pred_check
      _
    $region31: #{tpu_custom_call.1} parent=1 // pred_check_branch
      %73 = sbr.rel (0) target = $region33
    $region32: #{tpu_custom_call.1} parent=1 // pred_region
      %s75 = ssub.s32 1024, 1024
      %76 = vsyncadd [#allocation9], %s75
      %s77 = sshll.u32 [#allocation10], 4
      %s78 = int_to_ptr.vmem [resolvable:$true] %s77
      %83 = dma.hbm_to_vmem [thread:$0]  %s7, 1024, %s78, [#allocation9], 64, 64, 4
    $region33: #{tpu_custom_call.1} parent=1 // pred_fallthru
      _
    // Predicated region
    $region34: #{tpu_custom_call.1} parent=1 // pred_check
      _
    $region35: #{tpu_custom_call.1} parent=1 // pred_check_branch
      %85 = sbr.rel (0) target = $region37
    $region36: #{tpu_custom_call.1} parent=1 // pred_region
      _
    $region37: #{tpu_custom_call.1} parent=1 // pred_fallthru
      _
    // Predicated region
    $region38: #{tpu_custom_call.1} parent=1 // pred_check
      _
    $region39: #{tpu_custom_call.1} parent=1 // pred_check_branch
      %87 = sbr.rel (0) target = $region41
    $region40: #{tpu_custom_call.1} parent=1 // pred_region
      %88 = dma.done [#allocation3], 896
    $region41: #{tpu_custom_call.1} parent=1 // pred_fallthru
      _
    // Predicated region
    $region42: #{tpu_custom_call.1} parent=1 // pred_check
      _
    $region43: #{tpu_custom_call.1} parent=1 // pred_check_branch
      %90 = sbr.rel (0) target = $region45
    $region44: #{tpu_custom_call.1} parent=1 // pred_region
      %91 = dma.done [#allocation6], 12544
    $region45: #{tpu_custom_call.1} parent=1 // pred_fallthru
      _
    // Predicated region
    $region46: #{tpu_custom_call.1} parent=1 // pred_check
      _
    $region47: #{tpu_custom_call.1} parent=1 // pred_check_branch
      %93 = sbr.rel (0) target = $region49
    $region48: #{tpu_custom_call.1} parent=1 // pred_region
      %94 = dma.done [#allocation6], 2048
    $region49: #{tpu_custom_call.1} parent=1 // pred_fallthru
      _
    // Predicated region
    $region50: #{tpu_custom_call.1} parent=1 // pred_check
      _
    $region51: #{tpu_custom_call.1} parent=1 // pred_check_branch
      %96 = sbr.rel (0) target = $region53
    $region52: #{tpu_custom_call.1} parent=1 // pred_region
      %97 = dma.done [#allocation9], 1024
    $region53: #{tpu_custom_call.1} parent=1 // pred_fallthru
      _
    // Predicated region
    $region54: #{tpu_custom_call.1} parent=1 // pred_check
      _
    $region55: #{tpu_custom_call.1} parent=1 // pred_check_branch
      %99 = sbr.rel (0) target = $region57
    $region56: #{tpu_custom_call.1} parent=1 // pred_region
      %100 = dma.done [#allocation9], 1024
    $region57: #{tpu_custom_call.1} parent=1 // pred_fallthru
      _
    %v102 = vld [vmem:[#allocation2] sm:$0xff]
    %v103 = vld [vmem:[#allocation2 + $0x8] sm:$0xff]
    %v104 = vld [vmem:[#allocation2 + $0x10] sm:$0xff]
    %v105 = vld [vmem:[#allocation2 + $0x18] sm:$0xf]
    %v106 = vld [vmem:[#allocation2 + $0x1c] sm:$0xff]
    %v107 = vld [vmem:[#allocation2 + $0x24] sm:$0xff]
    %v108 = vld [vmem:[#allocation2 + $0x2c] sm:$0xff]
    %v109 = vld [vmem:[#allocation2 + $0x34] sm:$0xf]
    %v110 = vld [vmem:[#allocation5] sm:$0xff]
    %v111 = vld [vmem:[#allocation5 + $0x8] sm:$0xff]
    %v112 = vld [vmem:[#allocation5 + $0x10] sm:$0xff]
    %v113 = vld [vmem:[#allocation5 + $0x18] sm:$0xff]
    %v114 = vld [vmem:[#allocation5 + $0x20] sm:$0xff]
    %v115 = vld [vmem:[#allocation5 + $0x28] sm:$0xff]
    %v116 = vld [vmem:[#allocation5 + $0x30] sm:$0xff]
    %v117 = vld [vmem:[#allocation5 + $0x38] sm:$0xff]
    %v118 = vld [vmem:[#allocation5 + $0x40] sm:$0xff]
    %v119 = vld [vmem:[#allocation5 + $0x48] sm:$0xff]
    %v120 = vld [vmem:[#allocation5 + $0x50] sm:$0xff]
    %v121 = vld [vmem:[#allocation5 + $0x58] sm:$0xff]
    %v122 = vld [vmem:[#allocation5 + $0x60] sm:$0xff]
    %v123 = vld [vmem:[#allocation5 + $0x68] sm:$0xff]
    %v124 = vld [vmem:[#allocation5 + $0x70] sm:$0xff]
    %v125 = vld [vmem:[#allocation5 + $0x78] sm:$0xff]
    %v126 = vld [vmem:[#allocation5 + $0x80] sm:$0xff]
    %v127 = vld [vmem:[#allocation5 + $0x88] sm:$0xff]
    %v128 = vld [vmem:[#allocation5 + $0x90] sm:$0xff]
    %v129 = vld [vmem:[#allocation5 + $0x98] sm:$0xff]
    %v130 = vld [vmem:[#allocation5 + $0xa0] sm:$0xff]
    %v131 = vld [vmem:[#allocation5 + $0xa8] sm:$0xff]
    %v132 = vld [vmem:[#allocation5 + $0xb0] sm:$0xff]
    %v133 = vld [vmem:[#allocation5 + $0xb8] sm:$0xff]
    %v134 = vld [vmem:[#allocation5 + $0xc0] sm:$0xff]
    %v135 = vld [vmem:[#allocation5 + $0xc8] sm:$0xff]
    %v136 = vld [vmem:[#allocation5 + $0xd0] sm:$0xff]
    %v137 = vld [vmem:[#allocation5 + $0xd8] sm:$0xff]
    %v138 = vld [vmem:[#allocation5 + $0xe0] sm:$0xff]
    %v139 = vld [vmem:[#allocation5 + $0xe8] sm:$0xff]
    %v140 = vld [vmem:[#allocation5 + $0xf0] sm:$0xff]
    %v141 = vld [vmem:[#allocation5 + $0xf8] sm:$0xff]
    %v142 = vld [vmem:[#allocation5 + $0x100] sm:$0xff]
    %v143 = vld [vmem:[#allocation5 + $0x108] sm:$0xff]
    %v144 = vld [vmem:[#allocation5 + $0x110] sm:$0xff]
    %v145 = vld [vmem:[#allocation5 + $0x118] sm:$0xff]
    %v146 = vld [vmem:[#allocation5 + $0x120] sm:$0xff]
    %v147 = vld [vmem:[#allocation5 + $0x128] sm:$0xff]
    %v148 = vld [vmem:[#allocation5 + $0x130] sm:$0xff]
    %v149 = vld [vmem:[#allocation5 + $0x138] sm:$0xff]
    %v150 = vld [vmem:[#allocation5 + $0x140] sm:$0xff]
    %v151 = vld [vmem:[#allocation5 + $0x148] sm:$0xff]
    %v152 = vld [vmem:[#allocation5 + $0x150] sm:$0xff]
    %v153 = vld [vmem:[#allocation5 + $0x158] sm:$0xff]
    %v154 = vld [vmem:[#allocation5 + $0x160] sm:$0xff]
    %v155 = vld [vmem:[#allocation5 + $0x168] sm:$0xff]
    %v156 = vld [vmem:[#allocation5 + $0x170] sm:$0xff]
    %v157 = vld [vmem:[#allocation5 + $0x178] sm:$0xff]
    %v158 = vld [vmem:[#allocation5 + $0x180] sm:$0xff]
    %v159 = vld [vmem:[#allocation5 + $0x188] sm:$0xff]
    %v160 = vld [vmem:[#allocation5 + $0x190] sm:$0xff]
    %v161 = vld [vmem:[#allocation5 + $0x198] sm:$0xff]
    %v162 = vld [vmem:[#allocation5 + $0x1a0] sm:$0xff]
    %v163 = vld [vmem:[#allocation5 + $0x1a8] sm:$0xff]
    %v164 = vld [vmem:[#allocation5 + $0x1b0] sm:$0xff]
    %v165 = vld [vmem:[#allocation5 + $0x1b8] sm:$0xff]
    %v166 = vld [vmem:[#allocation5 + $0x1c0] sm:$0xff]
    %v167 = vld [vmem:[#allocation5 + $0x1c8] sm:$0xff]
    %v168 = vld [vmem:[#allocation5 + $0x1d0] sm:$0xff]
    %v169 = vld [vmem:[#allocation5 + $0x1d8] sm:$0xff]
    %v170 = vld [vmem:[#allocation5 + $0x1e0] sm:$0xff]
    %v171 = vld [vmem:[#allocation5 + $0x1e8] sm:$0xff]
    %v172 = vld [vmem:[#allocation5 + $0x1f0] sm:$0xff]
    %v173 = vld [vmem:[#allocation5 + $0x1f8] sm:$0xff]
    %v174 = vld [vmem:[#allocation5 + $0x200] sm:$0xff]
    %v175 = vld [vmem:[#allocation5 + $0x208] sm:$0xff]
    %v176 = vld [vmem:[#allocation5 + $0x210] sm:$0xff]
    %v177 = vld [vmem:[#allocation5 + $0x218] sm:$0xff]
    %v178 = vld [vmem:[#allocation5 + $0x220] sm:$0xff]
    %v179 = vld [vmem:[#allocation5 + $0x228] sm:$0xff]
    %v180 = vld [vmem:[#allocation5 + $0x230] sm:$0xff]
    %v181 = vld [vmem:[#allocation5 + $0x238] sm:$0xff]
    %v182 = vld [vmem:[#allocation5 + $0x240] sm:$0xff]
    %v183 = vld [vmem:[#allocation5 + $0x248] sm:$0xff]
    %v184 = vld [vmem:[#allocation5 + $0x250] sm:$0xff]
    %v185 = vld [vmem:[#allocation5 + $0x258] sm:$0xff]
    %v186 = vld [vmem:[#allocation5 + $0x260] sm:$0xff]
    %v187 = vld [vmem:[#allocation5 + $0x268] sm:$0xff]
    %v188 = vld [vmem:[#allocation5 + $0x270] sm:$0xff]
    %v189 = vld [vmem:[#allocation5 + $0x278] sm:$0xff]
    %v190 = vld [vmem:[#allocation5 + $0x280] sm:$0xff]
    %v191 = vld [vmem:[#allocation5 + $0x288] sm:$0xff]
    %v192 = vld [vmem:[#allocation5 + $0x290] sm:$0xff]
    %v193 = vld [vmem:[#allocation5 + $0x298] sm:$0xff]
    %v194 = vld [vmem:[#allocation5 + $0x2a0] sm:$0xff]
    %v195 = vld [vmem:[#allocation5 + $0x2a8] sm:$0xff]
    %v196 = vld [vmem:[#allocation5 + $0x2b0] sm:$0xff]
    %v197 = vld [vmem:[#allocation5 + $0x2b8] sm:$0xff]
    %v198 = vld [vmem:[#allocation5 + $0x2c0] sm:$0xff]
    %v199 = vld [vmem:[#allocation5 + $0x2c8] sm:$0xff]
    %v200 = vld [vmem:[#allocation5 + $0x2d0] sm:$0xff]
    %v201 = vld [vmem:[#allocation5 + $0x2d8] sm:$0xff]
    %v202 = vld [vmem:[#allocation5 + $0x2e0] sm:$0xff]
    %v203 = vld [vmem:[#allocation5 + $0x2e8] sm:$0xff]
    %v204 = vld [vmem:[#allocation5 + $0x2f0] sm:$0xff]
    %v205 = vld [vmem:[#allocation5 + $0x2f8] sm:$0xff]
    %v206 = vld [vmem:[#allocation5 + $0x300] sm:$0xff]
    %v207 = vld [vmem:[#allocation5 + $0x308] sm:$0xff]
    %v208 = vld [vmem:[%s2] sm:$0x3]
    %v210 = vlaneseq
    %v211 = vshrl.u32 %v210, 7
    %v212 = vsub.s32 0, %v211
    %v213 = vrot.slane %v208, %v212
    %v214 = vlaneseq
    %v215 = vshrl.u32 %v214, 7
    %v216 = vsub.s32 1, %v215
    %v217 = vrot.slane %v208, %v216
    %v228 = vunpack.c.l.b16 %v102
    %v229 = vunpack.c.h.b16 %v102
    %v230 = vunpack.c.l.b16 %v103
    %v231 = vunpack.c.h.b16 %v103
    %v232 = vunpack.c.l.b16 %v104
    %v233 = vunpack.c.h.b16 %v104
    %v234 = vunpack.c.l.b16 %v105
    %v235 = vunpack.c.l.b16 %v106
    %v236 = vunpack.c.h.b16 %v106
    %v237 = vunpack.c.l.b16 %v107
    %v238 = vunpack.c.h.b16 %v107
    %v239 = vunpack.c.l.b16 %v108
    %v240 = vunpack.c.h.b16 %v108
    %v241 = vunpack.c.l.b16 %v109
    %v242 = vpack.c.b16 %v235, %v228
    %v243 = vpack.c.b16 %v236, %v229
    %v244 = vpack.c.b16 %v237, %v230
    %v245 = vpack.c.b16 %v238, %v231
    %v246 = vpack.c.b16 %v239, %v232
    %v247 = vpack.c.b16 %v240, %v233
    %v248 = vpack.c.b16 %v241, %v234
    %v353 = vunpack.c.l.b16 %v110
    %v354 = vunpack.c.h.b16 %v110
    %v355 = vunpack.c.l.b16 %v111
    %v356 = vunpack.c.h.b16 %v111
    %v357 = vunpack.c.l.b16 %v112
    %v358 = vunpack.c.h.b16 %v112
    %v359 = vunpack.c.l.b16 %v113
    %v360 = vunpack.c.h.b16 %v113
    %v361 = vunpack.c.l.b16 %v114
    %v362 = vunpack.c.h.b16 %v114
    %v363 = vunpack.c.l.b16 %v115
    %v364 = vunpack.c.h.b16 %v115
    %v365 = vunpack.c.l.b16 %v116
    %v366 = vunpack.c.h.b16 %v116
    %v367 = vunpack.c.l.b16 %v117
    %v368 = vunpack.c.h.b16 %v117
    %v369 = vunpack.c.l.b16 %v118
    %v370 = vunpack.c.h.b16 %v118
    %v371 = vunpack.c.l.b16 %v119
    %v372 = vunpack.c.h.b16 %v119
    %v373 = vunpack.c.l.b16 %v120
    %v374 = vunpack.c.h.b16 %v120
    %v375 = vunpack.c.l.b16 %v121
    %v376 = vunpack.c.h.b16 %v121
    %v377 = vunpack.c.l.b16 %v122
    %v378 = vunpack.c.h.b16 %v122
    %v379 = vunpack.c.l.b16 %v123
    %v380 = vunpack.c.h.b16 %v123
    %v381 = vunpack.c.l.b16 %v124
    %v382 = vunpack.c.h.b16 %v124
    %v383 = vunpack.c.l.b16 %v125
    %v384 = vunpack.c.h.b16 %v125
    %v385 = vunpack.c.l.b16 %v126
    %v386 = vunpack.c.h.b16 %v126
    %v387 = vunpack.c.l.b16 %v127
    %v388 = vunpack.c.h.b16 %v127
    %v389 = vunpack.c.l.b16 %v128
    %v390 = vunpack.c.h.b16 %v128
    %v391 = vunpack.c.l.b16 %v129
    %v392 = vunpack.c.h.b16 %v129
    %v393 = vunpack.c.l.b16 %v130
    %v394 = vunpack.c.h.b16 %v130
    %v395 = vunpack.c.l.b16 %v131
    %v396 = vunpack.c.h.b16 %v131
    %v397 = vunpack.c.l.b16 %v132
    %v398 = vunpack.c.h.b16 %v132
    %v399 = vunpack.c.l.b16 %v133
    %v400 = vunpack.c.h.b16 %v133
    %v401 = vunpack.c.l.b16 %v134
    %v402 = vunpack.c.h.b16 %v134
    %v403 = vunpack.c.l.b16 %v135
    %v404 = vunpack.c.h.b16 %v135
    %v405 = vunpack.c.l.b16 %v136
    %v406 = vunpack.c.h.b16 %v136
    %v407 = vunpack.c.l.b16 %v137
    %v408 = vunpack.c.h.b16 %v137
    %v409 = vunpack.c.l.b16 %v138
    %v410 = vunpack.c.h.b16 %v138
    %v411 = vunpack.c.l.b16 %v139
    %v412 = vunpack.c.h.b16 %v139
    %v413 = vunpack.c.l.b16 %v140
    %v414 = vunpack.c.h.b16 %v140
    %v415 = vunpack.c.l.b16 %v141
    %v416 = vunpack.c.h.b16 %v141
    %v417 = vunpack.c.l.b16 %v142
    %v418 = vunpack.c.h.b16 %v142
    %v419 = vunpack.c.l.b16 %v143
    %v420 = vunpack.c.h.b16 %v143
    %v421 = vunpack.c.l.b16 %v144
    %v422 = vunpack.c.h.b16 %v144
    %v423 = vunpack.c.l.b16 %v145
    %v424 = vunpack.c.h.b16 %v145
    %v425 = vunpack.c.l.b16 %v146
    %v426 = vunpack.c.h.b16 %v146
    %v427 = vunpack.c.l.b16 %v147
    %v428 = vunpack.c.h.b16 %v147
    %v429 = vunpack.c.l.b16 %v148
    %v430 = vunpack.c.h.b16 %v148
    %v431 = vunpack.c.l.b16 %v149
    %v432 = vunpack.c.h.b16 %v149
    %v433 = vunpack.c.l.b16 %v150
    %v434 = vunpack.c.h.b16 %v150
    %v435 = vunpack.c.l.b16 %v151
    %v436 = vunpack.c.h.b16 %v151
    %v437 = vunpack.c.l.b16 %v152
    %v438 = vunpack.c.h.b16 %v152
    %v439 = vunpack.c.l.b16 %v153
    %v440 = vunpack.c.h.b16 %v153
    %v441 = vunpack.c.l.b16 %v154
    %v442 = vunpack.c.h.b16 %v154
    %v443 = vunpack.c.l.b16 %v155
    %v444 = vunpack.c.h.b16 %v155
    %v445 = vunpack.c.l.b16 %v156
    %v446 = vunpack.c.h.b16 %v156
    %v447 = vunpack.c.l.b16 %v157
    %v448 = vunpack.c.h.b16 %v157
    %v449 = vunpack.c.l.b16 %v158
    %v450 = vunpack.c.h.b16 %v158
    %v451 = vunpack.c.l.b16 %v159
    %v452 = vunpack.c.h.b16 %v159
    %v453 = vunpack.c.l.b16 %v160
    %v454 = vunpack.c.h.b16 %v160
    %v455 = vunpack.c.l.b16 %v161
    %v456 = vunpack.c.h.b16 %v161
    %v457 = vunpack.c.l.b16 %v162
    %v458 = vunpack.c.h.b16 %v162
    %v459 = vunpack.c.l.b16 %v163
    %v460 = vunpack.c.h.b16 %v163
    %v461 = vunpack.c.l.b16 %v164
    %v462 = vunpack.c.h.b16 %v164
    %v463 = vunpack.c.l.b16 %v165
    %v464 = vunpack.c.h.b16 %v165
    %v465 = vunpack.c.l.b16 %v166
    %v466 = vunpack.c.h.b16 %v166
    %v467 = vunpack.c.l.b16 %v167
    %v468 = vunpack.c.h.b16 %v167
    %v469 = vunpack.c.l.b16 %v168
    %v470 = vunpack.c.h.b16 %v168
    %v471 = vunpack.c.l.b16 %v169
    %v472 = vunpack.c.h.b16 %v169
    %v473 = vunpack.c.l.b16 %v170
    %v474 = vunpack.c.h.b16 %v170
    %v475 = vunpack.c.l.b16 %v171
    %v476 = vunpack.c.h.b16 %v171
    %v477 = vunpack.c.l.b16 %v172
    %v478 = vunpack.c.h.b16 %v172
    %v479 = vunpack.c.l.b16 %v173
    %v480 = vunpack.c.h.b16 %v173
    %v481 = vunpack.c.l.b16 %v174
    %v482 = vunpack.c.h.b16 %v174
    %v483 = vunpack.c.l.b16 %v175
    %v484 = vunpack.c.h.b16 %v175
    %v485 = vunpack.c.l.b16 %v176
    %v486 = vunpack.c.h.b16 %v176
    %v487 = vunpack.c.l.b16 %v177
    %v488 = vunpack.c.h.b16 %v177
    %v489 = vunpack.c.l.b16 %v178
    %v490 = vunpack.c.h.b16 %v178
    %v491 = vunpack.c.l.b16 %v179
    %v492 = vunpack.c.h.b16 %v179
    %v493 = vunpack.c.l.b16 %v180
    %v494 = vunpack.c.h.b16 %v180
    %v495 = vunpack.c.l.b16 %v181
    %v496 = vunpack.c.h.b16 %v181
    %v497 = vunpack.c.l.b16 %v182
    %v498 = vunpack.c.h.b16 %v182
    %v499 = vunpack.c.l.b16 %v183
    %v500 = vunpack.c.h.b16 %v183
    %v501 = vunpack.c.l.b16 %v184
    %v502 = vunpack.c.h.b16 %v184
    %v503 = vunpack.c.l.b16 %v185
    %v504 = vunpack.c.h.b16 %v185
    %v505 = vunpack.c.l.b16 %v186
    %v506 = vunpack.c.h.b16 %v186
    %v507 = vunpack.c.l.b16 %v187
    %v508 = vunpack.c.h.b16 %v187
    %v509 = vunpack.c.l.b16 %v188
    %v510 = vunpack.c.h.b16 %v188
    %v511 = vunpack.c.l.b16 %v189
    %v512 = vunpack.c.h.b16 %v189
    %v513 = vunpack.c.l.b16 %v190
    %v514 = vunpack.c.h.b16 %v190
    %v515 = vunpack.c.l.b16 %v191
    %v516 = vunpack.c.h.b16 %v191
    %v517 = vunpack.c.l.b16 %v192
    %v518 = vunpack.c.h.b16 %v192
    %v519 = vunpack.c.l.b16 %v193
    %v520 = vunpack.c.h.b16 %v193
    %v521 = vunpack.c.l.b16 %v194
    %v522 = vunpack.c.h.b16 %v194
    %v523 = vunpack.c.l.b16 %v195
    %v524 = vunpack.c.h.b16 %v195
    %v525 = vunpack.c.l.b16 %v196
    %v526 = vunpack.c.h.b16 %v196
    %v527 = vunpack.c.l.b16 %v197
    %v528 = vunpack.c.h.b16 %v197
    %v529 = vunpack.c.l.b16 %v198
    %v530 = vunpack.c.h.b16 %v198
    %v531 = vunpack.c.l.b16 %v199
    %v532 = vunpack.c.h.b16 %v199
    %v533 = vunpack.c.l.b16 %v200
    %v534 = vunpack.c.h.b16 %v200
    %v535 = vunpack.c.l.b16 %v201
    %v536 = vunpack.c.h.b16 %v201
    %v537 = vunpack.c.l.b16 %v202
    %v538 = vunpack.c.h.b16 %v202
    %v539 = vunpack.c.l.b16 %v203
    %v540 = vunpack.c.h.b16 %v203
    %v541 = vunpack.c.l.b16 %v204
    %v542 = vunpack.c.h.b16 %v204
    %v543 = vunpack.c.l.b16 %v205
    %v544 = vunpack.c.h.b16 %v205
    %v545 = vunpack.c.l.b16 %v206
    %v546 = vunpack.c.h.b16 %v206
    %v547 = vunpack.c.l.b16 %v207
    %v548 = vunpack.c.h.b16 %v207
    %v549 = vpack.c.b16 %v355, %v353
    %v550 = vpack.c.b16 %v356, %v354
    %v551 = vpack.c.b16 %v359, %v357
    %v552 = vpack.c.b16 %v360, %v358
    %v553 = vpack.c.b16 %v363, %v361
    %v554 = vpack.c.b16 %v364, %v362
    %v555 = vpack.c.b16 %v367, %v365
    %v556 = vpack.c.b16 %v368, %v366
    %v557 = vpack.c.b16 %v371, %v369
    %v558 = vpack.c.b16 %v372, %v370
    %v559 = vpack.c.b16 %v375, %v373
    %v560 = vpack.c.b16 %v376, %v374
    %v561 = vpack.c.b16 %v379, %v377
    %v562 = vpack.c.b16 %v380, %v378
    %v563 = vpack.c.b16 %v383, %v381
    %v564 = vpack.c.b16 %v384, %v382
    %v565 = vpack.c.b16 %v387, %v385
    %v566 = vpack.c.b16 %v388, %v386
    %v567 = vpack.c.b16 %v391, %v389
    %v568 = vpack.c.b16 %v392, %v390
    %v569 = vpack.c.b16 %v395, %v393
    %v570 = vpack.c.b16 %v396, %v394
    %v571 = vpack.c.b16 %v399, %v397
    %v572 = vpack.c.b16 %v400, %v398
    %v573 = vpack.c.b16 %v403, %v401
    %v574 = vpack.c.b16 %v404, %v402
    %v575 = vpack.c.b16 %v407, %v405
    %v576 = vpack.c.b16 %v408, %v406
    %v577 = vpack.c.b16 %v411, %v409
    %v578 = vpack.c.b16 %v412, %v410
    %v579 = vpack.c.b16 %v415, %v413
    %v580 = vpack.c.b16 %v416, %v414
    %v581 = vpack.c.b16 %v419, %v417
    %v582 = vpack.c.b16 %v420, %v418
    %v583 = vpack.c.b16 %v423, %v421
    %v584 = vpack.c.b16 %v424, %v422
    %v585 = vpack.c.b16 %v427, %v425
    %v586 = vpack.c.b16 %v428, %v426
    %v587 = vpack.c.b16 %v431, %v429
    %v588 = vpack.c.b16 %v432, %v430
    %v589 = vpack.c.b16 %v435, %v433
    %v590 = vpack.c.b16 %v436, %v434
    %v591 = vpack.c.b16 %v439, %v437
    %v592 = vpack.c.b16 %v440, %v438
    %v593 = vpack.c.b16 %v443, %v441
    %v594 = vpack.c.b16 %v444, %v442
    %v595 = vpack.c.b16 %v447, %v445
    %v596 = vpack.c.b16 %v448, %v446
    %v597 = vpack.c.b16 %v451, %v449
    %v598 = vpack.c.b16 %v452, %v450
    %v599 = vpack.c.b16 %v455, %v453
    %v600 = vpack.c.b16 %v456, %v454
    %v601 = vpack.c.b16 %v459, %v457
    %v602 = vpack.c.b16 %v460, %v458
    %v603 = vpack.c.b16 %v463, %v461
    %v604 = vpack.c.b16 %v464, %v462
    %v605 = vpack.c.b16 %v467, %v465
    %v606 = vpack.c.b16 %v468, %v466
    %v607 = vpack.c.b16 %v471, %v469
    %v608 = vpack.c.b16 %v472, %v470
    %v609 = vpack.c.b16 %v475, %v473
    %v610 = vpack.c.b16 %v476, %v474
    %v611 = vpack.c.b16 %v479, %v477
    %v612 = vpack.c.b16 %v480, %v478
    %v613 = vpack.c.b16 %v483, %v481
    %v614 = vpack.c.b16 %v484, %v482
    %v615 = vpack.c.b16 %v487, %v485
    %v616 = vpack.c.b16 %v488, %v486
    %v617 = vpack.c.b16 %v491, %v489
    %v618 = vpack.c.b16 %v492, %v490
    %v619 = vpack.c.b16 %v495, %v493
    %v620 = vpack.c.b16 %v496, %v494
    %v621 = vpack.c.b16 %v499, %v497
    %v622 = vpack.c.b16 %v500, %v498
    %v623 = vpack.c.b16 %v503, %v501
    %v624 = vpack.c.b16 %v504, %v502
    %v625 = vpack.c.b16 %v507, %v505
    %v626 = vpack.c.b16 %v508, %v506
    %v627 = vpack.c.b16 %v511, %v509
    %v628 = vpack.c.b16 %v512, %v510
    %v629 = vpack.c.b16 %v515, %v513
    %v630 = vpack.c.b16 %v516, %v514
    %v631 = vpack.c.b16 %v519, %v517
    %v632 = vpack.c.b16 %v520, %v518
    %v633 = vpack.c.b16 %v523, %v521
    %v634 = vpack.c.b16 %v524, %v522
    %v635 = vpack.c.b16 %v527, %v525
    %v636 = vpack.c.b16 %v528, %v526
    %v637 = vpack.c.b16 %v531, %v529
    %v638 = vpack.c.b16 %v532, %v530
    %v639 = vpack.c.b16 %v535, %v533
    %v640 = vpack.c.b16 %v536, %v534
    %v641 = vpack.c.b16 %v539, %v537
    %v642 = vpack.c.b16 %v540, %v538
    %v643 = vpack.c.b16 %v543, %v541
    %v644 = vpack.c.b16 %v544, %v542
    %v645 = vpack.c.b16 %v547, %v545
    %v646 = vpack.c.b16 %v548, %v546
    %vm745 = vcmask 130048
    %v747 = vsel %vm745, %v248, 0
    %749 = vmatprep.subr.bf16.mxu0 %v564
    %750 = vmatpush1.bf16.msra.mxu0 %v563
    %751 = vmatprep.subr.bf16.mxu0 %v562
    %752 = vmatpush1.bf16.msra.mxu0 %v561
    %753 = vmatprep.subr.bf16.mxu0 %v560
    %754 = vmatpush1.bf16.msra.mxu0 %v559
    %755 = vmatprep.subr.bf16.mxu0 %v558
    %756 = vmatpush1.bf16.msra.mxu0 %v557
    %757 = vmatprep.subr.bf16.mxu0 %v556
    %758 = vmatpush1.bf16.msra.mxu0 %v555
    %759 = vmatprep.subr.bf16.mxu0 %v554
    %760 = vmatpush1.bf16.msra.mxu0 %v553
    %761 = vmatprep.subr.bf16.mxu0 %v552
    %762 = vmatpush1.bf16.msra.mxu0 %v551
    %763 = vmatprep.subr.bf16.mxu0 %v550
    %764 = vmatpush1.bf16.msra.mxu0 %v549
    %765 = vmatprep.subr.bf16.mxu0 %v580
    %766 = vmatpush2.bf16.msra.mxu0 %v579
    %767 = vmatprep.subr.bf16.mxu0 %v578
    %768 = vmatpush2.bf16.msra.mxu0 %v577
    %769 = vmatprep.subr.bf16.mxu0 %v576
    %770 = vmatpush2.bf16.msra.mxu0 %v575
    %771 = vmatprep.subr.bf16.mxu0 %v574
    %772 = vmatpush2.bf16.msra.mxu0 %v573
    %773 = vmatprep.subr.bf16.mxu0 %v572
    %774 = vmatpush2.bf16.msra.mxu0 %v571
    %775 = vmatprep.subr.bf16.mxu0 %v570
    %776 = vmatpush2.bf16.msra.mxu0 %v569
    %777 = vmatprep.subr.bf16.mxu0 %v568
    %778 = vmatpush2.bf16.msra.mxu0 %v567
    %779 = vmatprep.subr.bf16.mxu0 %v566
    %780 = vmatpush2.bf16.msra.mxu0 %v565
    %781 = vmatprep.mubr.bf16.mxu0 %v243
    %782 = vmatmul.mubr.bf16.gmra.mxu0 %v242
    %v783 = vpop.f32.mrf.mxu0
    %v784 = vadd.f32 %v213, %v783
    %v785 = vpop.f32.mrf.mxu0
    %v786 = vadd.f32 %v217, %v785
    %v787 = vpop.f32.mrf.mxu0
    %v788 = vadd.f32 %v213, %v787
    %v789 = vpop.f32.mrf.mxu0
    %v790 = vadd.f32 %v217, %v789
    %791 = vdwg.mxu0
    %792 = vmatprep.subr.bf16.mxu0 %v596
    %793 = vmatpush1.bf16.msra.mxu0 %v595
    %794 = vmatprep.subr.bf16.mxu0 %v594
    %795 = vmatpush1.bf16.msra.mxu0 %v593
    %796 = vmatprep.subr.bf16.mxu0 %v592
    %797 = vmatpush1.bf16.msra.mxu0 %v591
    %798 = vmatprep.subr.bf16.mxu0 %v590
    %799 = vmatpush1.bf16.msra.mxu0 %v589
    %800 = vmatprep.subr.bf16.mxu0 %v588
    %801 = vmatpush1.bf16.msra.mxu0 %v587
    %802 = vmatprep.subr.bf16.mxu0 %v586
    %803 = vmatpush1.bf16.msra.mxu0 %v585
    %804 = vmatprep.subr.bf16.mxu0 %v584
    %805 = vmatpush1.bf16.msra.mxu0 %v583
    %806 = vmatprep.subr.bf16.mxu0 %v582
    %807 = vmatpush1.bf16.msra.mxu0 %v581
    %808 = vmatprep.subr.bf16.mxu0 %v612
    %809 = vmatpush2.bf16.msra.mxu0 %v611
    %810 = vmatprep.subr.bf16.mxu0 %v610
    %811 = vmatpush2.bf16.msra.mxu0 %v609
    %812 = vmatprep.subr.bf16.mxu0 %v608
    %813 = vmatpush2.bf16.msra.mxu0 %v607
    %814 = vmatprep.subr.bf16.mxu0 %v606
    %815 = vmatpush2.bf16.msra.mxu0 %v605
    %816 = vmatprep.subr.bf16.mxu0 %v604
    %817 = vmatpush2.bf16.msra.mxu0 %v603
    %818 = vmatprep.subr.bf16.mxu0 %v602
    %819 = vmatpush2.bf16.msra.mxu0 %v601
    %820 = vmatprep.subr.bf16.mxu0 %v600
    %821 = vmatpush2.bf16.msra.mxu0 %v599
    %822 = vmatprep.subr.bf16.mxu0 %v598
    %823 = vmatpush2.bf16.msra.mxu0 %v597
    %824 = vmatprep.mubr.bf16.mxu0 %v245
    %825 = vmatmul.mubr.bf16.gmra.mxu0 %v244
    %v826 = vpop.f32.mrf.mxu0
    %v827 = vadd.f32 %v784, %v826
    %v828 = vpop.f32.mrf.mxu0
    %v829 = vadd.f32 %v786, %v828
    %v830 = vpop.f32.mrf.mxu0
    %v831 = vadd.f32 %v788, %v830
    %v832 = vpop.f32.mrf.mxu0
    %v833 = vadd.f32 %v790, %v832
    %834 = vdwg.mxu0
    %835 = vmatprep.subr.bf16.mxu0 %v628
    %836 = vmatpush1.bf16.msra.mxu0 %v627
    %837 = vmatprep.subr.bf16.mxu0 %v626
    %838 = vmatpush1.bf16.msra.mxu0 %v625
    %839 = vmatprep.subr.bf16.mxu0 %v624
    %840 = vmatpush1.bf16.msra.mxu0 %v623
    %841 = vmatprep.subr.bf16.mxu0 %v622
    %842 = vmatpush1.bf16.msra.mxu0 %v621
    %843 = vmatprep.subr.bf16.mxu0 %v620
    %844 = vmatpush1.bf16.msra.mxu0 %v619
    %845 = vmatprep.subr.bf16.mxu0 %v618
    %846 = vmatpush1.bf16.msra.mxu0 %v617
    %847 = vmatprep.subr.bf16.mxu0 %v616
    %848 = vmatpush1.bf16.msra.mxu0 %v615
    %849 = vmatprep.subr.bf16.mxu0 %v614
    %850 = vmatpush1.bf16.msra.mxu0 %v613
    %851 = vmatprep.subr.bf16.mxu0 %v644
    %852 = vmatpush2.bf16.msra.mxu0 %v643
    %853 = vmatprep.subr.bf16.mxu0 %v642
    %854 = vmatpush2.bf16.msra.mxu0 %v641
    %855 = vmatprep.subr.bf16.mxu0 %v640
    %856 = vmatpush2.bf16.msra.mxu0 %v639
    %857 = vmatprep.subr.bf16.mxu0 %v638
    %858 = vmatpush2.bf16.msra.mxu0 %v637
    %859 = vmatprep.subr.bf16.mxu0 %v636
    %860 = vmatpush2.bf16.msra.mxu0 %v635
    %861 = vmatprep.subr.bf16.mxu0 %v634
    %862 = vmatpush2.bf16.msra.mxu0 %v633
    %863 = vmatprep.subr.bf16.mxu0 %v632
    %864 = vmatpush2.bf16.msra.mxu0 %v631
    %865 = vmatprep.subr.bf16.mxu0 %v630
    %866 = vmatpush2.bf16.msra.mxu0 %v629
    %867 = vmatprep.mubr.bf16.mxu0 %v247
    %868 = vmatmul.mubr.bf16.gmra.mxu0 %v246
    %v869 = vpop.f32.mrf.mxu0
    %v870 = vadd.f32 %v827, %v869
    %v871 = vpop.f32.mrf.mxu0
    %v872 = vadd.f32 %v829, %v871
    %v873 = vpop.f32.mrf.mxu0
    %v874 = vadd.f32 %v831, %v873
    %v875 = vpop.f32.mrf.mxu0
    %v876 = vadd.f32 %v833, %v875
    %877 = vdwg.mxu0
    %878 = vmatprep.subr.bf16.mxu0 0
    %879 = vmatpush1.bf16.msra.mxu0 0
    %880 = vmatprep.subr.bf16.mxu0 0
    %881 = vmatpush1.bf16.msra.mxu0 0
    %882 = vmatprep.subr.bf16.mxu0 0
    %883 = vmatpush1.bf16.msra.mxu0 0
    %884 = vmatprep.subr.bf16.mxu0 0
    %885 = vmatpush1.bf16.msra.mxu0 0
    %886 = vmatprep.subr.bf16.mxu0 0
    %887 = vmatpush1.bf16.msra.mxu0 0
    %888 = vmatprep.subr.bf16.mxu0 0
    %889 = vmatpush1.bf16.msra.mxu0 0
    %890 = vmatprep.subr.bf16.mxu0 0
    %891 = vmatpush1.bf16.msra.mxu0 0
    %892 = vmatprep.subr.bf16.mxu0 %v646
    %893 = vmatpush1.bf16.msra.mxu0 %v645
    %894 = vmatprep.subr.bf16.mxu0 0
    %895 = vmatpush2.bf16.msra.mxu0 0
    %896 = vmatprep.subr.bf16.mxu0 0
    %897 = vmatpush2.bf16.msra.mxu0 0
    %898 = vmatprep.subr.bf16.mxu0 0
    %899 = vmatpush2.bf16.msra.mxu0 0
    %900 = vmatprep.subr.bf16.mxu0 0
    %901 = vmatpush2.bf16.msra.mxu0 0
    %902 = vmatprep.subr.bf16.mxu0 0
    %903 = vmatpush2.bf16.msra.mxu0 0
    %904 = vmatprep.subr.bf16.mxu0 0
    %905 = vmatpush2.bf16.msra.mxu0 0
    %906 = vmatprep.subr.bf16.mxu0 0
    %907 = vmatpush2.bf16.msra.mxu0 0
    %908 = vmatprep.subr.bf16.mxu0 0
    %909 = vmatpush2.bf16.msra.mxu0 0
    %910 = vmatprep.mubr.bf16.mxu0 0
    %911 = vmatmul.mubr.bf16.gmra.mxu0 %v747
    %v912 = vpop.f32.mrf.mxu0
    %v913 = vadd.f32 %v870, %v912
    %v914 = vpop.f32.mrf.mxu0
    %v915 = vadd.f32 %v872, %v914
    %v916 = vpop.f32.mrf.mxu0
    %v917 = vadd.f32 %v874, %v916
    %v918 = vpop.f32.mrf.mxu0
    %v919 = vadd.f32 %v876, %v918
    %920 = vdwg.mxu0
    %v921 = vmax.f32 %v913, 0.0
    %v922 = vmax.f32 %v915, 0.0
    %v923 = vmax.f32 %v917, 0.0
    %v924 = vmax.f32 %v919, 0.0
    %v925 = vpack.c.bf16 %v923, %v921
    %v926 = vpack.c.bf16 %v924, %v922
    %v927 = vld [vmem:[#allocation7] sm:$0xf]
    %v928 = vld [vmem:[#allocation7 + $0x4] sm:$0xf]
    %v929 = vld [vmem:[#allocation7 + $0x8] sm:$0xf]
    %v930 = vld [vmem:[#allocation7 + $0xc] sm:$0xf]
    %v931 = vld [vmem:[#allocation7 + $0x10] sm:$0xf]
    %v932 = vld [vmem:[#allocation7 + $0x14] sm:$0xf]
    %v933 = vld [vmem:[#allocation7 + $0x18] sm:$0xf]
    %v934 = vld [vmem:[#allocation7 + $0x1c] sm:$0xf]
    %v935 = vld [vmem:[#allocation7 + $0x20] sm:$0xf]
    %v936 = vld [vmem:[#allocation7 + $0x24] sm:$0xf]
    %v937 = vld [vmem:[#allocation7 + $0x28] sm:$0xf]
    %v938 = vld [vmem:[#allocation7 + $0x2c] sm:$0xf]
    %v939 = vld [vmem:[#allocation7 + $0x30] sm:$0xf]
    %v940 = vld [vmem:[#allocation7 + $0x34] sm:$0xf]
    %v941 = vld [vmem:[#allocation7 + $0x38] sm:$0xf]
    %v942 = vld [vmem:[#allocation7 + $0x3c] sm:$0xf]
    %v943 = vld [vmem:[#allocation7 + $0x40] sm:$0xf]
    %v944 = vld [vmem:[#allocation7 + $0x44] sm:$0xf]
    %v945 = vld [vmem:[#allocation7 + $0x48] sm:$0xf]
    %v946 = vld [vmem:[#allocation7 + $0x4c] sm:$0xf]
    %v947 = vld [vmem:[#allocation7 + $0x50] sm:$0xf]
    %v948 = vld [vmem:[#allocation7 + $0x54] sm:$0xf]
    %v949 = vld [vmem:[#allocation7 + $0x58] sm:$0xf]
    %v950 = vld [vmem:[#allocation7 + $0x5c] sm:$0xf]
    %v951 = vld [vmem:[#allocation7 + $0x60] sm:$0xf]
    %v952 = vld [vmem:[#allocation7 + $0x64] sm:$0xf]
    %v953 = vld [vmem:[#allocation7 + $0x68] sm:$0xf]
    %v954 = vld [vmem:[#allocation7 + $0x6c] sm:$0xf]
    %v955 = vld [vmem:[#allocation7 + $0x70] sm:$0xf]
    %v956 = vld [vmem:[#allocation7 + $0x74] sm:$0xf]
    %v957 = vld [vmem:[#allocation7 + $0x78] sm:$0xf]
    %v958 = vld [vmem:[#allocation7 + $0x7c] sm:$0xf]
    %v959 = vld [vmem:[%s4] sm:$0x1]
    %v961 = vlaneseq
    %v962 = vshrl.u32 %v961, 7
    %v963 = vsub.s32 0, %v962
    %v964 = vrot.slane %v959, %v963
    %v998 = vunpack.c.l.b16 %v927
    %v999 = vunpack.c.l.b16 %v928
    %v1000 = vunpack.c.l.b16 %v929
    %v1001 = vunpack.c.l.b16 %v930
    %v1002 = vunpack.c.l.b16 %v931
    %v1003 = vunpack.c.l.b16 %v932
    %v1004 = vunpack.c.l.b16 %v933
    %v1005 = vunpack.c.l.b16 %v934
    %v1006 = vunpack.c.l.b16 %v935
    %v1007 = vunpack.c.l.b16 %v936
    %v1008 = vunpack.c.l.b16 %v937
    %v1009 = vunpack.c.l.b16 %v938
    %v1010 = vunpack.c.l.b16 %v939
    %v1011 = vunpack.c.l.b16 %v940
    %v1012 = vunpack.c.l.b16 %v941
    %v1013 = vunpack.c.l.b16 %v942
    %v1014 = vunpack.c.l.b16 %v943
    %v1015 = vunpack.c.l.b16 %v944
    %v1016 = vunpack.c.l.b16 %v945
    %v1017 = vunpack.c.l.b16 %v946
    %v1018 = vunpack.c.l.b16 %v947
    %v1019 = vunpack.c.l.b16 %v948
    %v1020 = vunpack.c.l.b16 %v949
    %v1021 = vunpack.c.l.b16 %v950
    %v1022 = vunpack.c.l.b16 %v951
    %v1023 = vunpack.c.l.b16 %v952
    %v1024 = vunpack.c.l.b16 %v953
    %v1025 = vunpack.c.l.b16 %v954
    %v1026 = vunpack.c.l.b16 %v955
    %v1027 = vunpack.c.l.b16 %v956
    %v1028 = vunpack.c.l.b16 %v957
    %v1029 = vunpack.c.l.b16 %v958
    %v1030 = vpack.c.b16 %v999, %v998
    %v1031 = vpack.c.b16 %v1001, %v1000
    %v1032 = vpack.c.b16 %v1003, %v1002
    %v1033 = vpack.c.b16 %v1005, %v1004
    %v1034 = vpack.c.b16 %v1007, %v1006
    %v1035 = vpack.c.b16 %v1009, %v1008
    %v1036 = vpack.c.b16 %v1011, %v1010
    %v1037 = vpack.c.b16 %v1013, %v1012
    %v1038 = vpack.c.b16 %v1015, %v1014
    %v1039 = vpack.c.b16 %v1017, %v1016
    %v1040 = vpack.c.b16 %v1019, %v1018
    %v1041 = vpack.c.b16 %v1021, %v1020
    %v1042 = vpack.c.b16 %v1023, %v1022
    %v1043 = vpack.c.b16 %v1025, %v1024
    %v1044 = vpack.c.b16 %v1027, %v1026
    %v1045 = vpack.c.b16 %v1029, %v1028
    %1062 = vmatprep.subr.bf16.mxu0 0
    %1063 = vmatpush1.bf16.msra.mxu0 %v1037
    %1064 = vmatprep.subr.bf16.mxu0 0
    %1065 = vmatpush1.bf16.msra.mxu0 %v1036
    %1066 = vmatprep.subr.bf16.mxu0 0
    %1067 = vmatpush1.bf16.msra.mxu0 %v1035
    %1068 = vmatprep.subr.bf16.mxu0 0
    %1069 = vmatpush1.bf16.msra.mxu0 %v1034
    %1070 = vmatprep.subr.bf16.mxu0 0
    %1071 = vmatpush1.bf16.msra.mxu0 %v1033
    %1072 = vmatprep.subr.bf16.mxu0 0
    %1073 = vmatpush1.bf16.msra.mxu0 %v1032
    %1074 = vmatprep.subr.bf16.mxu0 0
    %1075 = vmatpush1.bf16.msra.mxu0 %v1031
    %1076 = vmatprep.subr.bf16.mxu0 0
    %1077 = vmatpush1.bf16.msra.mxu0 %v1030
    %1078 = vmatprep.subr.bf16.mxu0 0
    %1079 = vmatpush2.bf16.msra.mxu0 %v1045
    %1080 = vmatprep.subr.bf16.mxu0 0
    %1081 = vmatpush2.bf16.msra.mxu0 %v1044
    %1082 = vmatprep.subr.bf16.mxu0 0
    %1083 = vmatpush2.bf16.msra.mxu0 %v1043
    %1084 = vmatprep.subr.bf16.mxu0 0
    %1085 = vmatpush2.bf16.msra.mxu0 %v1042
    %1086 = vmatprep.subr.bf16.mxu0 0
    %1087 = vmatpush2.bf16.msra.mxu0 %v1041
    %1088 = vmatprep.subr.bf16.mxu0 0
    %1089 = vmatpush2.bf16.msra.mxu0 %v1040
    %1090 = vmatprep.subr.bf16.mxu0 0
    %1091 = vmatpush2.bf16.msra.mxu0 %v1039
    %1092 = vmatprep.subr.bf16.mxu0 0
    %1093 = vmatpush2.bf16.msra.mxu0 %v1038
    %1094 = vmatprep.mubr.bf16.mxu0 %v926
    %1095 = vmatmul.mubr.bf16.gmra.mxu0 %v925
    %v1096 = vpop.f32.mrf.mxu0
    %v1097 = vadd.f32 %v964, %v1096
    %v1098 = vpop.f32.mrf.mxu0
    %v1099 = vpop.f32.mrf.mxu0
    %v1100 = vadd.f32 %v964, %v1099
    %v1101 = vpop.f32.mrf.mxu0
    %1102 = vdwg.mxu0
    %v1103 = vmax.f32 %v1097, 0.0
    %v1104 = vmax.f32 %v1100, 0.0
    %v1105 = vpack.c.bf16 %v1104, %v1103
    %v1106 = vld [vmem:[#allocation8] sm:$0xf]
    %v1107 = vld [vmem:[#allocation8 + $0x4] sm:$0xf]
    %v1108 = vld [vmem:[#allocation8 + $0x8] sm:$0xf]
    %v1109 = vld [vmem:[#allocation8 + $0xc] sm:$0xf]
    %v1110 = vld [vmem:[#allocation8 + $0x10] sm:$0xf]
    %v1111 = vld [vmem:[#allocation8 + $0x14] sm:$0xf]
    %v1112 = vld [vmem:[#allocation8 + $0x18] sm:$0xf]
    %v1113 = vld [vmem:[#allocation8 + $0x1c] sm:$0xf]
    %v1114 = vld [vmem:[#allocation8 + $0x20] sm:$0xf]
    %v1115 = vld [vmem:[#allocation8 + $0x24] sm:$0xf]
    %v1116 = vld [vmem:[#allocation8 + $0x28] sm:$0xf]
    %v1117 = vld [vmem:[#allocation8 + $0x2c] sm:$0xf]
    %v1118 = vld [vmem:[#allocation8 + $0x30] sm:$0xf]
    %v1119 = vld [vmem:[#allocation8 + $0x34] sm:$0xf]
    %v1120 = vld [vmem:[#allocation8 + $0x38] sm:$0xf]
    %v1121 = vld [vmem:[#allocation8 + $0x3c] sm:$0xf]
    %v1122 = vld [vmem:[%s6] sm:$0x1]
    %v1124 = vlaneseq
    %v1125 = vshrl.u32 %v1124, 7
    %v1126 = vsub.s32 0, %v1125
    %v1127 = vrot.slane %v1122, %v1126
    %v1145 = vunpack.c.l.b16 %v1106
    %v1146 = vunpack.c.l.b16 %v1107
    %v1147 = vunpack.c.l.b16 %v1108
    %v1148 = vunpack.c.l.b16 %v1109
    %v1149 = vunpack.c.l.b16 %v1110
    %v1150 = vunpack.c.l.b16 %v1111
    %v1151 = vunpack.c.l.b16 %v1112
    %v1152 = vunpack.c.l.b16 %v1113
    %v1153 = vunpack.c.l.b16 %v1114
    %v1154 = vunpack.c.l.b16 %v1115
    %v1155 = vunpack.c.l.b16 %v1116
    %v1156 = vunpack.c.l.b16 %v1117
    %v1157 = vunpack.c.l.b16 %v1118
    %v1158 = vunpack.c.l.b16 %v1119
    %v1159 = vunpack.c.l.b16 %v1120
    %v1160 = vunpack.c.l.b16 %v1121
    %v1161 = vpack.c.b16 %v1146, %v1145
    %v1162 = vpack.c.b16 %v1148, %v1147
    %v1163 = vpack.c.b16 %v1150, %v1149
    %v1164 = vpack.c.b16 %v1152, %v1151
    %v1165 = vpack.c.b16 %v1154, %v1153
    %v1166 = vpack.c.b16 %v1156, %v1155
    %v1167 = vpack.c.b16 %v1158, %v1157
    %v1168 = vpack.c.b16 %v1160, %v1159
    %1177 = vmatprep.subr.bf16.mxu0 0
    %1178 = vmatpush1.bf16.msra.mxu0 %v1168
    %1179 = vmatprep.subr.bf16.mxu0 0
    %1180 = vmatpush1.bf16.msra.mxu0 %v1167
    %1181 = vmatprep.subr.bf16.mxu0 0
    %1182 = vmatpush1.bf16.msra.mxu0 %v1166
    %1183 = vmatprep.subr.bf16.mxu0 0
    %1184 = vmatpush1.bf16.msra.mxu0 %v1165
    %1185 = vmatprep.subr.bf16.mxu0 0
    %1186 = vmatpush1.bf16.msra.mxu0 %v1164
    %1187 = vmatprep.subr.bf16.mxu0 0
    %1188 = vmatpush1.bf16.msra.mxu0 %v1163
    %1189 = vmatprep.subr.bf16.mxu0 0
    %1190 = vmatpush1.bf16.msra.mxu0 %v1162
    %1191 = vmatprep.subr.bf16.mxu0 0
    %1192 = vmatpush1.bf16.msra.mxu0 %v1161
    %1193 = vmatprep.subr.bf16.mxu0 0
    %1194 = vmatpush2.bf16.msra.mxu0 0
    %1195 = vmatprep.subr.bf16.mxu0 0
    %1196 = vmatpush2.bf16.msra.mxu0 0
    %1197 = vmatprep.subr.bf16.mxu0 0
    %1198 = vmatpush2.bf16.msra.mxu0 0
    %1199 = vmatprep.subr.bf16.mxu0 0
    %1200 = vmatpush2.bf16.msra.mxu0 0
    %1201 = vmatprep.subr.bf16.mxu0 0
    %1202 = vmatpush2.bf16.msra.mxu0 0
    %1203 = vmatprep.subr.bf16.mxu0 0
    %1204 = vmatpush2.bf16.msra.mxu0 0
    %1205 = vmatprep.subr.bf16.mxu0 0
    %1206 = vmatpush2.bf16.msra.mxu0 0
    %1207 = vmatprep.subr.bf16.mxu0 0
    %1208 = vmatpush2.bf16.msra.mxu0 0
    %1209 = vmatprep.mubr.bf16.mxu0 0
    %1210 = vmatmul.mubr.bf16.gmra.mxu0 %v1105
    %v1211 = vpop.f32.mrf.mxu0
    %v1212 = vadd.f32 %v1127, %v1211
    %v1213 = vpop.f32.mrf.mxu0
    %v1214 = vpop.f32.mrf.mxu0
    %v1215 = vadd.f32 %v1127, %v1214
    %v1216 = vpop.f32.mrf.mxu0
    %1217 = vdwg.mxu0
    %v1218 = vmax.f32 %v1212, 0.0
    %v1219 = vmax.f32 %v1215, 0.0
    %v1220 = vpack.c.bf16 %v1219, %v1218
    %v1221 = vld [vmem:[#allocation10] sm:$0xf]
    %v1222 = vld [vmem:[#allocation10 + $0x4] sm:$0xf]
    %v1223 = vld [vmem:[#allocation10 + $0x8] sm:$0xf]
    %v1224 = vld [vmem:[#allocation10 + $0xc] sm:$0xf]
    %v1225 = vld [vmem:[#allocation10 + $0x10] sm:$0xf]
    %v1226 = vld [vmem:[#allocation10 + $0x14] sm:$0xf]
    %v1227 = vld [vmem:[#allocation10 + $0x18] sm:$0xf]
    %v1228 = vld [vmem:[#allocation10 + $0x1c] sm:$0xf]
    %v1229 = vld [vmem:[#allocation10 + $0x20] sm:$0xf]
    %v1230 = vld [vmem:[#allocation10 + $0x24] sm:$0xf]
    %v1231 = vld [vmem:[#allocation10 + $0x28] sm:$0xf]
    %v1232 = vld [vmem:[#allocation10 + $0x2c] sm:$0xf]
    %v1233 = vld [vmem:[#allocation10 + $0x30] sm:$0xf]
    %v1234 = vld [vmem:[#allocation10 + $0x34] sm:$0xf]
    %v1235 = vld [vmem:[#allocation10 + $0x38] sm:$0xf]
    %v1236 = vld [vmem:[#allocation10 + $0x3c] sm:$0xf]
    %v1237 = vld [vmem:[%s8] sm:$0x1]
    %v1239 = vlaneseq
    %v1240 = vshrl.u32 %v1239, 7
    %v1241 = vsub.s32 0, %v1240
    %v1242 = vrot.slane %v1237, %v1241
    %v1260 = vunpack.c.l.b16 %v1221
    %v1261 = vunpack.c.l.b16 %v1222
    %v1262 = vunpack.c.l.b16 %v1223
    %v1263 = vunpack.c.l.b16 %v1224
    %v1264 = vunpack.c.l.b16 %v1225
    %v1265 = vunpack.c.l.b16 %v1226
    %v1266 = vunpack.c.l.b16 %v1227
    %v1267 = vunpack.c.l.b16 %v1228
    %v1268 = vunpack.c.l.b16 %v1229
    %v1269 = vunpack.c.l.b16 %v1230
    %v1270 = vunpack.c.l.b16 %v1231
    %v1271 = vunpack.c.l.b16 %v1232
    %v1272 = vunpack.c.l.b16 %v1233
    %v1273 = vunpack.c.l.b16 %v1234
    %v1274 = vunpack.c.l.b16 %v1235
    %v1275 = vunpack.c.l.b16 %v1236
    %v1276 = vpack.c.b16 %v1261, %v1260
    %v1277 = vpack.c.b16 %v1263, %v1262
    %v1278 = vpack.c.b16 %v1265, %v1264
    %v1279 = vpack.c.b16 %v1267, %v1266
    %v1280 = vpack.c.b16 %v1269, %v1268
    %v1281 = vpack.c.b16 %v1271, %v1270
    %v1282 = vpack.c.b16 %v1273, %v1272
    %v1283 = vpack.c.b16 %v1275, %v1274
    %1292 = vmatprep.subr.bf16.mxu0 0
    %1293 = vmatpush1.bf16.msra.mxu0 %v1283
    %1294 = vmatprep.subr.bf16.mxu0 0
    %1295 = vmatpush1.bf16.msra.mxu0 %v1282
    %1296 = vmatprep.subr.bf16.mxu0 0
    %1297 = vmatpush1.bf16.msra.mxu0 %v1281
    %1298 = vmatprep.subr.bf16.mxu0 0
    %1299 = vmatpush1.bf16.msra.mxu0 %v1280
    %1300 = vmatprep.subr.bf16.mxu0 0
    %1301 = vmatpush1.bf16.msra.mxu0 %v1279
    %1302 = vmatprep.subr.bf16.mxu0 0
    %1303 = vmatpush1.bf16.msra.mxu0 %v1278
    %1304 = vmatprep.subr.bf16.mxu0 0
    %1305 = vmatpush1.bf16.msra.mxu0 %v1277
    %1306 = vmatprep.subr.bf16.mxu0 0
    %1307 = vmatpush1.bf16.msra.mxu0 %v1276
    %1308 = vmatprep.subr.bf16.mxu0 0
    %1309 = vmatpush2.bf16.msra.mxu0 0
    %1310 = vmatprep.subr.bf16.mxu0 0
    %1311 = vmatpush2.bf16.msra.mxu0 0
    %1312 = vmatprep.subr.bf16.mxu0 0
    %1313 = vmatpush2.bf16.msra.mxu0 0
    %1314 = vmatprep.subr.bf16.mxu0 0
    %1315 = vmatpush2.bf16.msra.mxu0 0
    %1316 = vmatprep.subr.bf16.mxu0 0
    %1317 = vmatpush2.bf16.msra.mxu0 0
    %1318 = vmatprep.subr.bf16.mxu0 0
    %1319 = vmatpush2.bf16.msra.mxu0 0
    %1320 = vmatprep.subr.bf16.mxu0 0
    %1321 = vmatpush2.bf16.msra.mxu0 0
    %1322 = vmatprep.subr.bf16.mxu0 0
    %1323 = vmatpush2.bf16.msra.mxu0 0
    %1324 = vmatprep.mubr.bf16.mxu0 0
    %1325 = vmatmul.mubr.bf16.gmra.mxu0 %v1220
    %v1326 = vpop.f32.mrf.mxu0
    %v1327 = vadd.f32 %v1242, %v1326
    %v1328 = vpop.f32.mrf.mxu0
    %v1329 = vpop.f32.mrf.mxu0
    %v1330 = vadd.f32 %v1242, %v1329
    %v1331 = vpop.f32.mrf.mxu0
    %1332 = vdwg.mxu0
    %1333 = vst [vmem:[#allocation11] sm:$0xff] %v1327
    %1334 = vst [vmem:[#allocation11 + $0x8] sm:$0xff] %v1330
    // Predicated region
    $region58: #{tpu_custom_call.1} parent=1 // pred_check
      _
    $region59: #{tpu_custom_call.1} parent=1 // pred_check_branch
      %1336 = sbr.rel (0) target = $region61
    $region60: #{tpu_custom_call.1} parent=1 // pred_region
      %s1338 = ssub.s32 256, 256
      %1339 = vsyncadd [#allocation4], %s1338
      %s1340 = sshll.u32 [#allocation11], 4
      %s1341 = int_to_ptr.vmem [resolvable:$true] %s1340
      %1346 = dma.vmem_to_hbm [thread:$0]  %s1341, 256, %s9, [#allocation4], 128, 128, 8
    $region61: #{tpu_custom_call.1} parent=1 // pred_fallthru
      _
    // Predicated region
    $region62: #{tpu_custom_call.1} parent=1 // pred_check
      _
    $region63: #{tpu_custom_call.1} parent=1 // pred_check_branch
      %1348 = sbr.rel (0) target = $region65
    $region64: #{tpu_custom_call.1} parent=1 // pred_region
      %1349 = dma.done [#allocation4], 256
    $region65: #{tpu_custom_call.1} parent=1 // pred_fallthru
      _
    %1350 = vsyncpa [#allocation3], 1
    %1351 = vsyncpa [#allocation6], 1
    %1352 = vsyncpa [#allocation9], 1
    %1353 = vsyncpa [#allocation4], 1

</llo_original>
